<compile_context>
chip_gen: v5e
topology: v5e:2x2
jax: 0.10.0
libtpu: 0.0.40
codegen_flags: <defaults>
</compile_context>

<pallas_src>
import jax
import jax.numpy as jnp
from jax.experimental import pallas as pl
from jax.experimental.pallas import tpu as pltpu


def _linear_kernel(x_ref, w_ref, b_ref, o_ref, acc_ref):
    """One (tm, tn) output tile of y = x @ W + b, accumulated over the K axis."""
    k = pl.program_id(2)

    @pl.when(k == 0)
    def _init():
        # Fold the bias into the accumulator init (replaces a per-step epilogue
        # add; the broadcast happens once per output tile, not per K step).
        acc_ref[...] = jnp.broadcast_to(
            b_ref[...].astype(jnp.float32), acc_ref.shape
        )

    acc_ref[...] += jnp.dot(
        x_ref[...], w_ref[...], preferred_element_type=jnp.float32
    )

    @pl.when(k == pl.num_programs(2) - 1)
    def _finalize():
        o_ref[...] = acc_ref[...].astype(o_ref.dtype)


def _pick_tile(dim, preferred):
    """Largest of `preferred` that divides `dim`, else the full dim (always legal)."""
    return preferred if dim % preferred == 0 else dim


def data_parallel_forward(
    x,
    w,
    b,
    *,
    num_devices,
    tm=128,
    tn=256,
    tk=256,
    compute_dtype=jnp.bfloat16,
):
    """DataParallel.forward: scatter x on dim 0 -> parallel_apply(Linear) -> gather on dim 0.

    Scatter/gather with replicated weights collapses to a full-batch matmul,
    which we implement as a standard tiled MXU kernel.
    """
    B, D_in = x.shape
    D_out = w.shape[1]
    # DataParallel contract: batch is an integer multiple of #devices.
    assert B % num_devices == 0, "batch must be an integer multiple of #devices"
    out_dtype = x.dtype

    # bf16 operands for the MXU (f32 accumulation inside the kernel); bias and
    # the epilogue stay in f32 (v5e has no bf16 VPU path).
    x_c = x.astype(compute_dtype)
    w_c = w.astype(compute_dtype)
    b_c = b.astype(jnp.float32)

    tm = _pick_tile(B, tm)
    tn = _pick_tile(D_out, tn)
    tk = _pick_tile(D_in, tk)
    grid = (B // tm, D_out // tn, D_in // tk)

    grid_spec = pltpu.PrefetchScalarGridSpec(
        num_scalar_prefetch=0,
        grid=grid,
        in_specs=[
            pl.BlockSpec((tm, tk), lambda i, j, k: (i, k)),   # activations
            pl.BlockSpec((tk, tn), lambda i, j, k: (k, j)),   # weight tile
            pl.BlockSpec((1, tn), lambda i, j, k: (0, j)),    # bias tile
        ],
        out_specs=pl.BlockSpec((tm, tn), lambda i, j, k: (i, j)),
        scratch_shapes=[pltpu.VMEM((tm, tn), jnp.float32)],
    )

    cost = pl.CostEstimate(
        flops=2 * B * D_in * D_out,
        transcendentals=0,
        bytes_accessed=(
            x_c.size * x_c.dtype.itemsize
            + w_c.size * w_c.dtype.itemsize
            + b_c.size * b_c.dtype.itemsize
            + B * D_out * jnp.dtype(out_dtype).itemsize
        ),
    )

    return pl.pallas_call(
        _linear_kernel,
        out_shape=jax.ShapeDtypeStruct((B, D_out), out_dtype),
        grid_spec=grid_spec,
        compiler_params=pltpu.CompilerParams(
            # M and N tiles are independent -> megacore-parallel; K accumulates.
            dimension_semantics=("parallel", "parallel", "arbitrary"),
        ),
        cost_estimate=cost,
    )(x_c, w_c, b_c)


if __name__ == "__main__":
    # Small shapes consistent with the module: batch divisible by #devices,
    # lane-dense (multiple-of-128) feature dims, and >1 tile on both M and K.
    NUM_DEVICES = 2
    B, D_IN, D_OUT = 256, 512, 256

    key = jax.random.PRNGKey(0)
    kx, kw, kb = jax.random.split(key, 3)

    x = jax.random.normal(kx, (B, D_IN), dtype=jnp.float32)
    # Deterministic parameter init for the wrapped Linear module.
    w = jax.random.normal(kw, (D_IN, D_OUT), dtype=jnp.float32) * 0.05
    b = jax.random.normal(kb, (1, D_OUT), dtype=jnp.float32) * 0.05

    out = data_parallel_forward(x, w, b, num_devices=NUM_DEVICES)
    out = jax.block_until_ready(out)

    # Reference: running the wrapped module on the full (gathered) batch must
    # equal scatter -> per-chunk apply -> gather.  Same bf16 operands + f32
    # accumulation as the kernel.
    ref = (
        jnp.dot(
            x.astype(jnp.bfloat16),
            w.astype(jnp.bfloat16),
            preferred_element_type=jnp.float32,
        )
        + b
    )
    assert out.shape == (B, D_OUT)
    assert jnp.allclose(out, ref, atol=1e-3, rtol=1e-3)

    print("KERNEL_OK")
</pallas_src>

<mosaic_0001>
module attributes {stable_mosaic.version = 11 : i64} {
  func.func @_linear_kernel(%arg0: i32, %arg1: i32, %arg2: i32, %arg3: memref<128x256xbf16, #tpu.memory_space<vmem>>, %arg4: memref<256x256xbf16, #tpu.memory_space<vmem>>, %arg5: memref<1x256xf32, #tpu.memory_space<vmem>>, %arg6: memref<128x256xf32, #tpu.memory_space<vmem>>, %arg7: memref<128x256xf32, #tpu.memory_space<vmem>>) attributes {dimension_semantics = [#tpu.dimension_semantics<parallel>, #tpu.dimension_semantics<parallel>, #tpu.dimension_semantics<arbitrary>], iteration_bounds = array<i64: 2, 1, 2>, scalar_prefetch = 0 : i64, scratch_operands = 1 : i64, tpu.core_type = #tpu.core_type<tc>, window_params = [{transform_indices = @transform_0, window_bounds = array<i64: 128, 256>}, {transform_indices = @transform_1, window_bounds = array<i64: 256, 256>}, {transform_indices = @transform_2, window_bounds = array<i64: 1, 256>}, {transform_indices = @transform_3, window_bounds = array<i64: 128, 256>}]} {
    %c0_i32 = arith.constant 0 : i32
    %0 = arith.cmpi eq, %arg2, %c0_i32 : i32
    %1 = arith.extui %0 : i1 to i32
    %c0_i32_0 = arith.constant 0 : i32
    %2 = arith.cmpi ne, %1, %c0_i32_0 : i32
    scf.if %2 {
      %c0_9 = arith.constant 0 : index
      %c0_10 = arith.constant 0 : index
      %12 = vector.load %arg5[%c0_9, %c0_10] : memref<1x256xf32, #tpu.memory_space<vmem>>, vector<1x256xf32>
      %13 = vector.shape_cast %12 : vector<1x256xf32> to vector<1x256xf32>
      %14 = vector.broadcast %13 : vector<1x256xf32> to vector<128x256xf32>
      %c0_11 = arith.constant 0 : index
      %c0_12 = arith.constant 0 : index
      %15 = vector.load %arg7[%c0_11, %c0_12] : memref<128x256xf32, #tpu.memory_space<vmem>>, vector<128x256xf32>
      tpu.vector_store %arg7[%c0_11, %c0_12], %14 {strides = array<i32>} : memref<128x256xf32, #tpu.memory_space<vmem>>, vector<128x256xf32>,
    } else {
    }
    %c0 = arith.constant 0 : index
    %c0_1 = arith.constant 0 : index
    %3 = vector.load %arg7[%c0, %c0_1] : memref<128x256xf32, #tpu.memory_space<vmem>>, vector<128x256xf32>
    %c0_2 = arith.constant 0 : index
    %c0_3 = arith.constant 0 : index
    %4 = vector.load %arg3[%c0_2, %c0_3] : memref<128x256xbf16, #tpu.memory_space<vmem>>, vector<128x256xbf16>
    %c0_4 = arith.constant 0 : index
    %c0_5 = arith.constant 0 : index
    %5 = vector.load %arg4[%c0_4, %c0_5] : memref<256x256xbf16, #tpu.memory_space<vmem>>, vector<256x256xbf16>
    %cst = arith.constant dense<0.000000e+00> : vector<128x256xf32>
    %6 = tpu.matmul %4, %5, %cst {dimension_numbers = #tpu.dot_dimension_numbers<[1], [0], [0], [1], [0, 0, 1, 1], [], []>} : vector<128x256xbf16>, vector<256x256xbf16>, vector<128x256xf32> -> vector<128x256xf32>
    %7 = arith.addf %3, %6 : vector<128x256xf32>
    %c0_6 = arith.constant 0 : index
    %c0_7 = arith.constant 0 : index
    %8 = vector.load %arg7[%c0_6, %c0_7] : memref<128x256xf32, #tpu.memory_space<vmem>>, vector<128x256xf32>
    tpu.vector_store %arg7[%c0_6, %c0_7], %7 {strides = array<i32>} : memref<128x256xf32, #tpu.memory_space<vmem>>, vector<128x256xf32>,
    %c1_i32 = arith.constant 1 : i32
    %9 = arith.cmpi eq, %arg2, %c1_i32 : i32
    %10 = arith.extui %9 : i1 to i32
    %c0_i32_8 = arith.constant 0 : i32
    %11 = arith.cmpi ne, %10, %c0_i32_8 : i32
    scf.if %11 {
      %c0_9 = arith.constant 0 : index
      %c0_10 = arith.constant 0 : index
      %12 = vector.load %arg7[%c0_9, %c0_10] : memref<128x256xf32, #tpu.memory_space<vmem>>, vector<128x256xf32>
      %c0_11 = arith.constant 0 : index
      %c0_12 = arith.constant 0 : index
      %13 = vector.load %arg6[%c0_11, %c0_12] : memref<128x256xf32, #tpu.memory_space<vmem>>, vector<128x256xf32>
      tpu.vector_store %arg6[%c0_11, %c0_12], %12 {strides = array<i32>} : memref<128x256xf32, #tpu.memory_space<vmem>>, vector<128x256xf32>,
    } else {
    }
    return
  }
  func.func @transform_0(%arg0: i32, %arg1: i32, %arg2: i32) -> (i32, i32) {
    %c0_i32 = arith.constant 0 : i32
    return %arg0, %arg2 : i32, i32
  }
  func.func @transform_1(%arg0: i32, %arg1: i32, %arg2: i32) -> (i32, i32) {
    %c0_i32 = arith.constant 0 : i32
    return %arg2, %arg1 : i32, i32
  }
  func.func @transform_2(%arg0: i32, %arg1: i32, %arg2: i32) -> (i32, i32) {
    %c0_i32 = arith.constant 0 : i32
    %c0_i32_0 = arith.constant 0 : i32
    return %c0_i32, %arg1 : i32, i32
  }
  func.func @transform_3(%arg0: i32, %arg1: i32, %arg2: i32) -> (i32, i32) {
    %c0_i32 = arith.constant 0 : i32
    return %arg0, %arg1 : i32, i32
  }
}

</mosaic_0001>

<llo_original>
// kernel: tpu_custom_call.1
$region0: #{tpu_custom_call.1}
  #allocation0 [shape = 'u32[]', space=smem, size = 0x4, offset = 0x4, fixed_abs, tag = 'smem constant byte address 0x4 - core index']
  #allocation1 [shape = 'u32[72,128]{1,0:T(1,128)}', space=vmem, size = 0x9000, scoped, tag = 'internal scratch']
  #allocation2 [shape = 'f32[128,256]{1,0:T(8,128)}', space=vmem, size = 0x20000, scoped, tag = 'scratch operand']
  %s0 = inlined_call_operand.hbm [shape: bf16[256,512], index: 0, kind: input, shape index: {}]
  %s1 = inlined_call_operand.hbm [shape: bf16[512,256], index: 1, kind: input, shape index: {}]
  %s2 = inlined_call_operand.hbm [shape: f32[1,256], index: 2, kind: input, shape index: {}]
  %s3 = inlined_call_operand.hbm [shape: f32[256,256], index: 3, kind: output, shape index: {}]
  %s4 = sld [smem:[#allocation0]]
  $region65: #{tpu_custom_call.1} parent=0
    _
  %s6 = ssub.s32 1, %s4
  %s7 = scalar_select 0, %s6, %s4
  $region1: #{tpu_custom_call.1} parent=0
    #allocation3 [shape = 'u8[131072]{0}', space=vmem, size = 0x20000, scoped, tag = 'input window, operand 0']
    #allocation4 [shape = 's32[2]{0}', space=sflag, size = 0x8, scoped, tag = 'scoped memory for tpu_custom_call.1']
    #allocation5 [shape = 's32[2]{0}', space=sflag, size = 0x8, scoped, tag = 'scoped memory for tpu_custom_call.1']
    #allocation6 [shape = 'u8[262144]{0}', space=vmem, size = 0x40000, scoped, tag = 'input window, operand 1']
    #allocation7 [shape = 's32[2]{0}', space=sflag, size = 0x8, scoped, tag = 'scoped memory for tpu_custom_call.1']
    #allocation8 [shape = 'u8[1024]{0}', space=vmem, size = 0x400, scoped, tag = 'input window, operand 2, single buffered']
    #allocation9 [shape = 'u8[262144]{0}', space=vmem, size = 0x40000, scoped, tag = 'output window, operand 0']
    %8 = vsyncpa [#allocation4], 0
    %s9 = scalar_lea.sflag [#allocation4], 1
    %10 = vsyncpa %s9, 0
    %11 = vsyncpa [#allocation7], 0
    %s12 = scalar_lea.sflag [#allocation7], 1
    %13 = vsyncpa %s12, 0
    %14 = vsyncpa [#allocation5], 0
    %s15 = scalar_lea.sflag [#allocation5], 1
    %16 = vsyncpa %s15, 0
    loop: start=0, step=1, limit=6
    $region2: #{tpu_custom_call.1} parent=1 // loop_pre_header
      _
    $region3: #{tpu_custom_call.1} parent=1 // loop_header
      %s18 = sphi 0, %s22
      %p19 = scmp.ge.s32.totalorder %s18, 6
      %s25 = sphi 0, %s44
      %s26 = sphi 0, %s40
      %s27 = sphi 0, %s36
      %s28 = sphi 0, %s25
      %s29 = sphi 0, %s26
      %s30 = sphi 0, %s27
      %s31 = sphi 0, %s28
      %s32 = sphi 0, %s29
      %s33 = sphi 0, %s30
      %s49 = sphi 0, %s51
      %s52 = sphi 0, %s49
      %s53 = sphi 0, %s52
      %s69 = sphi 0, %s53
      %s77 = sphi 0, %s79
      %s80 = sphi 0, %s77
      %s81 = sphi 0, %s80
      %s97 = sphi 0, %s81
      %s103 = sphi 0, %s105
      %s106 = sphi 0, %s103
      %s107 = sphi 0, %s106
      %s123 = sphi 0, %s107
      %s131 = sphi 0, %s133
      %s134 = sphi 0, %s131
      %s135 = sphi 0, %s134
      %s151 = sphi 0, %s135
    $region4: #{tpu_custom_call.1} parent=1 // loop_header_branch
      %21 = sbr.rel (%p19) target = $region8
    $region5: #{tpu_custom_call.1} parent=1 // loop_body
      %s23 = ssub.s32 %s18, 1
      %s24 = ssub.s32 %s18, 2
      %s34 = sadd.s32 1, %s27
      %p35 = scmp.ge.s32.totalorder %s34, 2
      %s36 = scalar_select %p35, 0, %s34
      %s37 = sadd.s32 1, %s26
      %s38 = scalar_select %p35, %s37, %s26
      %p39 = scmp.ge.s32.totalorder %s38, 1
      %s40 = scalar_select %p39, 0, %s38
      %s41 = sadd.s32 1, %s25
      %s42 = scalar_select %p39, %s41, %s25
      %p43 = scmp.ge.s32.totalorder %s42, 2
      %s44 = scalar_select %p43, 0, %s42
      %s45 = ssub.s32 %s25, %s44
      %s46 = ssub.s32 %s27, %s36
      %s47 = sor.u32 %s45, %s46
      %p48 = scmp.eq.s32.totalorder %s47, 0
      %s50 = sadd.s32 %s49, 1
      %s51 = scalar_select %p48, %s49, %s50
      %p54 = pneg %p48
      %p55 = scmp.eq.s32.totalorder %s18, 3
      %p56 = por %p54, %p55
      %p57 = scmp.ne.s32.totalorder %s49, %s52
      %p58 = scmp.eq.s32.totalorder %s18, 0
      %p59 = por %p57, %p58
      %p60 = scmp.ne.s32.totalorder %s49, %s52
      %p61 = scmp.eq.s32.totalorder %s23, 3
      %p62 = por %p60, %p61
      %p63 = scmp.ne.s32.totalorder %s52, %s53
      %p64 = scmp.eq.s32.totalorder %s23, 0
      %p65 = por %p63, %p64
      %p66 = scmp.ne.s32.totalorder %s52, %s53
      %p67 = scmp.eq.s32.totalorder %s24, 3
      %p68 = por %p66, %p67
      %p70 = scmp.ne.s32.totalorder %s53, %s69
      %p71 = scmp.eq.s32.totalorder %s24, 0
      %p72 = por %p70, %p71
      %s73 = ssub.s32 %s27, %s36
      %s74 = ssub.s32 %s26, %s40
      %s75 = sor.u32 %s73, %s74
      %p76 = scmp.eq.s32.totalorder %s75, 0
      %s78 = sadd.s32 %s77, 1
      %s79 = scalar_select %p76, %s77, %s78
      %p82 = pneg %p76
      %p83 = scmp.eq.s32.totalorder %s18, 3
      %p84 = por %p82, %p83
      %p85 = scmp.ne.s32.totalorder %s77, %s80
      %p86 = scmp.eq.s32.totalorder %s18, 0
      %p87 = por %p85, %p86
      %p88 = scmp.ne.s32.totalorder %s77, %s80
      %p89 = scmp.eq.s32.totalorder %s23, 3
      %p90 = por %p88, %p89
      %p91 = scmp.ne.s32.totalorder %s80, %s81
      %p92 = scmp.eq.s32.totalorder %s23, 0
      %p93 = por %p91, %p92
      %p94 = scmp.ne.s32.totalorder %s80, %s81
      %p95 = scmp.eq.s32.totalorder %s24, 3
      %p96 = por %p94, %p95
      %p98 = scmp.ne.s32.totalorder %s81, %s97
      %p99 = scmp.eq.s32.totalorder %s24, 0
      %p100 = por %p98, %p99
      %s101 = ssub.s32 %s26, %s40
      %p102 = scmp.eq.s32.totalorder %s101, 0
      %s104 = sadd.s32 %s103, 1
      %s105 = scalar_select %p102, %s103, %s104
      %p108 = pneg %p102
      %p109 = scmp.eq.s32.totalorder %s18, 3
      %p110 = por %p108, %p109
      %p111 = scmp.ne.s32.totalorder %s103, %s106
      %p112 = scmp.eq.s32.totalorder %s18, 0
      %p113 = por %p111, %p112
      %p114 = scmp.ne.s32.totalorder %s103, %s106
      %p115 = scmp.eq.s32.totalorder %s23, 3
      %p116 = por %p114, %p115
      %p117 = scmp.ne.s32.totalorder %s106, %s107
      %p118 = scmp.eq.s32.totalorder %s23, 0
      %p119 = por %p117, %p118
      %p120 = scmp.ne.s32.totalorder %s106, %s107
      %p121 = scmp.eq.s32.totalorder %s24, 3
      %p122 = por %p120, %p121
      %p124 = scmp.ne.s32.totalorder %s107, %s123
      %p125 = scmp.eq.s32.totalorder %s24, 0
      %p126 = por %p124, %p125
      %s127 = ssub.s32 %s25, %s44
      %s128 = ssub.s32 %s26, %s40
      %s129 = sor.u32 %s127, %s128
      %p130 = scmp.eq.s32.totalorder %s129, 0
      %s132 = sadd.s32 %s131, 1
      %s133 = scalar_select %p130, %s131, %s132
      %p136 = pneg %p130
      %p137 = scmp.eq.s32.totalorder %s18, 3
      %p138 = por %p136, %p137
      %p139 = scmp.ne.s32.totalorder %s131, %s134
      %p140 = scmp.eq.s32.totalorder %s18, 0
      %p141 = por %p139, %p140
      %p142 = scmp.ne.s32.totalorder %s131, %s134
      %p143 = scmp.eq.s32.totalorder %s23, 3
      %p144 = por %p142, %p143
      %p145 = scmp.ne.s32.totalorder %s134, %s135
      %p146 = scmp.eq.s32.totalorder %s23, 0
      %p147 = por %p145, %p146
      %p148 = scmp.ne.s32.totalorder %s134, %s135
      %p149 = scmp.eq.s32.totalorder %s24, 3
      %p150 = por %p148, %p149
      %p152 = scmp.ne.s32.totalorder %s135, %s151
      %p153 = scmp.eq.s32.totalorder %s24, 0
      %p154 = por %p152, %p153
      %p155 = scmp.le.s32.totalorder 1, %s18
      %p156 = scmp.lt.s32.totalorder %s18, 5
      %p157 = pnand %p155, %p156
      %p158 = pneg %p157
      // Predicated region
      $region9: #{tpu_custom_call.1} parent=5 // pred_check
        _
      $region10: #{tpu_custom_call.1} parent=5 // pred_check_branch
        %160 = sbr.rel (%p157) target = $region12
      $region11: #{tpu_custom_call.1} parent=5 // pred_region
        %s161 = ssub.s32 %s18, 1
        // Predicated region
        $region13: #{tpu_custom_call.1} parent=11 // pred_check
          %p162 = pneg %p119
        $region14: #{tpu_custom_call.1} parent=11 // pred_check_branch
          %164 = sbr.rel (%p162) target = $region16
        $region15: #{tpu_custom_call.1} parent=11 // pred_region
          %s165 = smul.u32 2, %s29
          %167 = vsyncadd [#allocation7], 0
          %s168 = scalar_lea.hbm %s2, %s165
          %s170 = sshll.u32 %s168, 4
          %s171 = int_to_ptr.hbm [resolvable:$true] %s170
          %s172 = sshll.u32 [#allocation8], 4
          %s173 = int_to_ptr.vmem [resolvable:$true] %s172
          %175 = dma.hbm_to_vmem [thread:$0]  %s171, 32, %s173, [#allocation7]
        $region16: #{tpu_custom_call.1} parent=11 // pred_fallthru
          _
      $region12: #{tpu_custom_call.1} parent=5 // pred_fallthru
        _
      %p176 = scmp.lt.s32.totalorder %s18, 4
      // Predicated region
      $region17: #{tpu_custom_call.1} parent=5 // pred_check
        %p177 = pneg %p176
      $region18: #{tpu_custom_call.1} parent=5 // pred_check_branch
        %179 = sbr.rel (%p177) target = $region20
      $region19: #{tpu_custom_call.1} parent=5 // pred_region
        // Predicated region
        $region21: #{tpu_custom_call.1} parent=19 // pred_check
          %p180 = pneg %p59
        $region22: #{tpu_custom_call.1} parent=19 // pred_check_branch
          %182 = sbr.rel (%p180) target = $region24
        $region23: #{tpu_custom_call.1} parent=19 // pred_region
          %s183 = sand.u32 %s49, 1
          %s184 = scalar_lea.sflag [#allocation4], %s183
          %s185 = sand.u32 %s49, 1
          %s186 = smul.addr %s185, 128
          %s187 = scalar_lea.vmem [#allocation3], %s186
          %s188 = smul.u32 16, %s25
          %s189 = smul.u32 2, %s27
          %191 = vsyncadd %s184, 0
          %s192 = smul.addr %s188, 4
          %s193 = sadd.s32 %s189, %s192
          %s194 = smul.addr %s193, 4
          %s195 = scalar_lea.hbm %s0, %s194
          %s196 = sshll.u32 %s195, 4
          %s197 = int_to_ptr.hbm [resolvable:$true] %s196
          %s198 = sshll.u32 %s187, 4
          %s199 = int_to_ptr.vmem [resolvable:$true] %s198
          %204 = dma.hbm_to_vmem [thread:$0]  %s197, 2048, %s199, %s184, 256, 128, 8
        $region24: #{tpu_custom_call.1} parent=19 // pred_fallthru
          _
        // Predicated region
        $region25: #{tpu_custom_call.1} parent=19 // pred_check
          %p205 = pneg %p87
        $region26: #{tpu_custom_call.1} parent=19 // pred_check_branch
          %207 = sbr.rel (%p205) target = $region28
        $region27: #{tpu_custom_call.1} parent=19 // pred_region
          %s208 = sand.u32 %s18, 1
          %s209 = scalar_lea.sflag [#allocation7], %s208
          %s210 = sand.u32 %s77, 1
          %s211 = smul.addr %s210, 256
          %s212 = scalar_lea.vmem [#allocation6], %s211
          %s213 = smul.u32 32, %s27
          %s214 = smul.u32 2, %s26
          %216 = vsyncadd %s209, 0
          %s217 = smul.addr %s213, 2
          %s218 = sadd.s32 %s214, %s217
          %s219 = smul.addr %s218, 4
          %s220 = scalar_lea.hbm %s1, %s219
          %s221 = sshll.u32 %s220, 4
          %s222 = int_to_ptr.hbm [resolvable:$true] %s221
          %s223 = sshll.u32 %s212, 4
          %s224 = int_to_ptr.vmem [resolvable:$true] %s223
          %229 = dma.hbm_to_vmem [thread:$0]  %s222, 4096, %s224, %s209, 128, 128, 8
        $region28: #{tpu_custom_call.1} parent=19 // pred_fallthru
          _
      $region20: #{tpu_custom_call.1} parent=5 // pred_fallthru
        _
      %p230 = scmp.le.s32.totalorder 1, %s18
      %p231 = scmp.lt.s32.totalorder %s18, 5
      %p232 = pnand %p230, %p231
      %p233 = pneg %p232
      // Predicated region
      $region29: #{tpu_custom_call.1} parent=5 // pred_check
        _
      $region30: #{tpu_custom_call.1} parent=5 // pred_check_branch
        %235 = sbr.rel (%p232) target = $region32
      $region31: #{tpu_custom_call.1} parent=5 // pred_region
        %s236 = ssub.s32 %s18, 1
        %s237 = sand.u32 %s52, 1
        %s238 = scalar_lea.sflag [#allocation4], %s237
        %s239 = sand.u32 %s52, 1
        %s240 = smul.addr %s239, 128
        %s241 = scalar_lea.vmem [#allocation3], %s240
        // Predicated region
        $region33: #{tpu_custom_call.1} parent=31 // pred_check
          %p242 = pneg %p65
        $region34: #{tpu_custom_call.1} parent=31 // pred_check_branch
          %244 = sbr.rel (%p242) target = $region36
        $region35: #{tpu_custom_call.1} parent=31 // pred_region
          %246 = dma.done %s238, 2048
        $region36: #{tpu_custom_call.1} parent=31 // pred_fallthru
          _
        %s247 = sand.u32 %s23, 1
        %s248 = scalar_lea.sflag [#allocation7], %s247
        %s249 = sand.u32 %s80, 1
        %s250 = smul.addr %s249, 256
        %s251 = scalar_lea.vmem [#allocation6], %s250
        // Predicated region
        $region37: #{tpu_custom_call.1} parent=31 // pred_check
          %p252 = pneg %p93
        $region38: #{tpu_custom_call.1} parent=31 // pred_check_branch
          %254 = sbr.rel (%p252) target = $region40
        $region39: #{tpu_custom_call.1} parent=31 // pred_region
          %256 = dma.done %s248, 4096
        $region40: #{tpu_custom_call.1} parent=31 // pred_fallthru
          _
        // Predicated region
        $region41: #{tpu_custom_call.1} parent=31 // pred_check
          %p257 = pneg %p119
        $region42: #{tpu_custom_call.1} parent=31 // pred_check_branch
          %259 = sbr.rel (%p257) target = $region44
        $region43: #{tpu_custom_call.1} parent=31 // pred_region
          %261 = dma.done [#allocation7], 32
        $region44: #{tpu_custom_call.1} parent=31 // pred_fallthru
          _
        %s262 = sand.u32 %s52, 1
        %s263 = scalar_lea.sflag [#allocation4], %s262
        %s264 = sand.u32 %s52, 1
        %s265 = smul.addr %s264, 128
        %s266 = scalar_lea.vmem [#allocation3], %s265
        %p267 = pneg %p65
        %p268 = pneg %p62
        %s269 = sand.u32 %s23, 1
        %s270 = scalar_lea.sflag [#allocation7], %s269
        %s271 = sand.u32 %s80, 1
        %s272 = smul.addr %s271, 256
        %s273 = scalar_lea.vmem [#allocation6], %s272
        %p274 = pneg %p93
        %p275 = pneg %p90
        %p276 = pneg %p119
        %p277 = pneg %p116
        %p278 = pneg %p147
        %p279 = pneg %p144
        %s280 = sand.u32 %s134, 1
        %s281 = scalar_lea.sflag [#allocation5], %s280
        %s282 = sand.u32 %s134, 1
        %s283 = smul.addr %s282, 256
        %s284 = scalar_lea.vmem [#allocation9], %s283
        %s285 = smul.u32 16, %s28
        %s286 = smul.u32 2, %s30
        %s287 = smul.u32 32, %s30
        %s288 = smul.u32 2, %s29
        %s289 = smul.u32 2, %s29
        %s290 = smul.u32 16, %s28
        %s291 = smul.u32 2, %s29
        %p292 = scmp.eq.s32.totalorder %s30, 0
        // Predicated region
        $region45: #{tpu_custom_call.1} parent=31 // pred_check
          %p293 = pneg %p292
        $region46: #{tpu_custom_call.1} parent=31 // pred_check_branch
          %295 = sbr.rel (%p293) target = $region48
        $region47: #{tpu_custom_call.1} parent=31 // pred_region
          %v296 = vld [vmem:[#allocation8] sm:$0x3]
          %v298 = vperm.slane %v296, 0
          %v299 = vperm.slane %v296, 1
          %302 = vst [vmem:[#allocation2] sm:$0xff] %v298
          %303 = vst [vmem:[#allocation2 + $0x8] sm:$0xff] %v299
          %304 = vst [vmem:[#allocation2 + $0x10] sm:$0xff] %v298
          %305 = vst [vmem:[#allocation2 + $0x18] sm:$0xff] %v299
          %306 = vst [vmem:[#allocation2 + $0x20] sm:$0xff] %v298
          %307 = vst [vmem:[#allocation2 + $0x28] sm:$0xff] %v299
          %308 = vst [vmem:[#allocation2 + $0x30] sm:$0xff] %v298
          %309 = vst [vmem:[#allocation2 + $0x38] sm:$0xff] %v299
          %310 = vst [vmem:[#allocation2 + $0x40] sm:$0xff] %v298
          %311 = vst [vmem:[#allocation2 + $0x48] sm:$0xff] %v299
          %312 = vst [vmem:[#allocation2 + $0x50] sm:$0xff] %v298
          %313 = vst [vmem:[#allocation2 + $0x58] sm:$0xff] %v299
          %314 = vst [vmem:[#allocation2 + $0x60] sm:$0xff] %v298
          %315 = vst [vmem:[#allocation2 + $0x68] sm:$0xff] %v299
          %316 = vst [vmem:[#allocation2 + $0x70] sm:$0xff] %v298
          %317 = vst [vmem:[#allocation2 + $0x78] sm:$0xff] %v299
          %318 = vst [vmem:[#allocation2 + $0x80] sm:$0xff] %v298
          %319 = vst [vmem:[#allocation2 + $0x88] sm:$0xff] %v299
          %320 = vst [vmem:[#allocation2 + $0x90] sm:$0xff] %v298
          %321 = vst [vmem:[#allocation2 + $0x98] sm:$0xff] %v299
          %322 = vst [vmem:[#allocation2 + $0xa0] sm:$0xff] %v298
          %323 = vst [vmem:[#allocation2 + $0xa8] sm:$0xff] %v299
          %324 = vst [vmem:[#allocation2 + $0xb0] sm:$0xff] %v298
          %325 = vst [vmem:[#allocation2 + $0xb8] sm:$0xff] %v299
          %326 = vst [vmem:[#allocation2 + $0xc0] sm:$0xff] %v298
          %327 = vst [vmem:[#allocation2 + $0xc8] sm:$0xff] %v299
          %328 = vst [vmem:[#allocation2 + $0xd0] sm:$0xff] %v298
          %329 = vst [vmem:[#allocation2 + $0xd8] sm:$0xff] %v299
          %330 = vst [vmem:[#allocation2 + $0xe0] sm:$0xff] %v298
          %331 = vst [vmem:[#allocation2 + $0xe8] sm:$0xff] %v299
          %332 = vst [vmem:[#allocation2 + $0xf0] sm:$0xff] %v298
          %333 = vst [vmem:[#allocation2 + $0xf8] sm:$0xff] %v299
        $region48: #{tpu_custom_call.1} parent=31 // pred_fallthru
          _
        %v334 = vld [vmem:[#allocation2] sm:$0xff]
        %v335 = vld [vmem:[#allocation2 + $0x8] sm:$0xff]
        %v336 = vld [vmem:[#allocation2 + $0x10] sm:$0xff]
        %v337 = vld [vmem:[#allocation2 + $0x18] sm:$0xff]
        %v338 = vld [vmem:[#allocation2 + $0x20] sm:$0xff]
        %v339 = vld [vmem:[#allocation2 + $0x28] sm:$0xff]
        %v340 = vld [vmem:[#allocation2 + $0x30] sm:$0xff]
        %v341 = vld [vmem:[#allocation2 + $0x38] sm:$0xff]
        %v342 = vld [vmem:[#allocation2 + $0x40] sm:$0xff]
        %v343 = vld [vmem:[#allocation2 + $0x48] sm:$0xff]
        %v344 = vld [vmem:[#allocation2 + $0x50] sm:$0xff]
        %v345 = vld [vmem:[#allocation2 + $0x58] sm:$0xff]
        %v346 = vld [vmem:[#allocation2 + $0x60] sm:$0xff]
        %v347 = vld [vmem:[#allocation2 + $0x68] sm:$0xff]
        %v348 = vld [vmem:[#allocation2 + $0x70] sm:$0xff]
        %v349 = vld [vmem:[#allocation2 + $0x78] sm:$0xff]
        %v350 = vld [vmem:[#allocation2 + $0x80] sm:$0xff]
        %v351 = vld [vmem:[#allocation2 + $0x88] sm:$0xff]
        %v352 = vld [vmem:[#allocation2 + $0x90] sm:$0xff]
        %v353 = vld [vmem:[#allocation2 + $0x98] sm:$0xff]
        %v354 = vld [vmem:[#allocation2 + $0xa0] sm:$0xff]
        %v355 = vld [vmem:[#allocation2 + $0xa8] sm:$0xff]
        %v356 = vld [vmem:[#allocation2 + $0xb0] sm:$0xff]
        %v357 = vld [vmem:[#allocation2 + $0xb8] sm:$0xff]
        %v358 = vld [vmem:[#allocation2 + $0xc0] sm:$0xff]
        %v359 = vld [vmem:[#allocation2 + $0xc8] sm:$0xff]
        %v360 = vld [vmem:[#allocation2 + $0xd0] sm:$0xff]
        %v361 = vld [vmem:[#allocation2 + $0xd8] sm:$0xff]
        %v362 = vld [vmem:[#allocation2 + $0xe0] sm:$0xff]
        %v363 = vld [vmem:[#allocation2 + $0xe8] sm:$0xff]
        %v364 = vld [vmem:[#allocation2 + $0xf0] sm:$0xff]
        %v365 = vld [vmem:[#allocation2 + $0xf8] sm:$0xff]
        %v366 = vld [vmem:[%s241] sm:$0xff]
        %v367 = vld [vmem:[%s241 + $0x8] sm:$0xff]
        %v368 = vld [vmem:[%s241 + $0x10] sm:$0xff]
        %v369 = vld [vmem:[%s241 + $0x18] sm:$0xff]
        %v370 = vld [vmem:[%s241 + $0x20] sm:$0xff]
        %v371 = vld [vmem:[%s241 + $0x28] sm:$0xff]
        %v372 = vld [vmem:[%s241 + $0x30] sm:$0xff]
        %v373 = vld [vmem:[%s241 + $0x38] sm:$0xff]
        %v374 = vld [vmem:[%s241 + $0x40] sm:$0xff]
        %v375 = vld [vmem:[%s241 + $0x48] sm:$0xff]
        %v376 = vld [vmem:[%s241 + $0x50] sm:$0xff]
        %v377 = vld [vmem:[%s241 + $0x58] sm:$0xff]
        %v378 = vld [vmem:[%s241 + $0x60] sm:$0xff]
        %v379 = vld [vmem:[%s241 + $0x68] sm:$0xff]
        %v380 = vld [vmem:[%s241 + $0x70] sm:$0xff]
        %v381 = vld [vmem:[%s241 + $0x78] sm:$0xff]
        %v382 = vld [vmem:[%s251] sm:$0xff]
        %v383 = vld [vmem:[%s251 + $0x8] sm:$0xff]
        %v384 = vld [vmem:[%s251 + $0x10] sm:$0xff]
        %v385 = vld [vmem:[%s251 + $0x18] sm:$0xff]
        %v386 = vld [vmem:[%s251 + $0x20] sm:$0xff]
        %v387 = vld [vmem:[%s251 + $0x28] sm:$0xff]
        %v388 = vld [vmem:[%s251 + $0x30] sm:$0xff]
        %v389 = vld [vmem:[%s251 + $0x38] sm:$0xff]
        %v390 = vld [vmem:[%s251 + $0x40] sm:$0xff]
        %v391 = vld [vmem:[%s251 + $0x48] sm:$0xff]
        %v392 = vld [vmem:[%s251 + $0x50] sm:$0xff]
        %v393 = vld [vmem:[%s251 + $0x58] sm:$0xff]
        %v394 = vld [vmem:[%s251 + $0x60] sm:$0xff]
        %v395 = vld [vmem:[%s251 + $0x68] sm:$0xff]
        %v396 = vld [vmem:[%s251 + $0x70] sm:$0xff]
        %v397 = vld [vmem:[%s251 + $0x78] sm:$0xff]
        %v398 = vld [vmem:[%s251 + $0x80] sm:$0xff]
        %v399 = vld [vmem:[%s251 + $0x88] sm:$0xff]
        %v400 = vld [vmem:[%s251 + $0x90] sm:$0xff]
        %v401 = vld [vmem:[%s251 + $0x98] sm:$0xff]
        %v402 = vld [vmem:[%s251 + $0xa0] sm:$0xff]
        %v403 = vld [vmem:[%s251 + $0xa8] sm:$0xff]
        %v404 = vld [vmem:[%s251 + $0xb0] sm:$0xff]
        %v405 = vld [vmem:[%s251 + $0xb8] sm:$0xff]
        %v406 = vld [vmem:[%s251 + $0xc0] sm:$0xff]
        %v407 = vld [vmem:[%s251 + $0xc8] sm:$0xff]
        %v408 = vld [vmem:[%s251 + $0xd0] sm:$0xff]
        %v409 = vld [vmem:[%s251 + $0xd8] sm:$0xff]
        %v410 = vld [vmem:[%s251 + $0xe0] sm:$0xff]
        %v411 = vld [vmem:[%s251 + $0xe8] sm:$0xff]
        %v412 = vld [vmem:[%s251 + $0xf0] sm:$0xff]
        %v413 = vld [vmem:[%s251 + $0xf8] sm:$0xff]
        %v430 = vunpack.c.l.b16 %v366
        %v431 = vunpack.c.h.b16 %v366
        %v432 = vunpack.c.l.b16 %v367
        %v433 = vunpack.c.h.b16 %v367
        %v434 = vunpack.c.l.b16 %v368
        %v435 = vunpack.c.h.b16 %v368
        %v436 = vunpack.c.l.b16 %v369
        %v437 = vunpack.c.h.b16 %v369
        %v438 = vunpack.c.l.b16 %v370
        %v439 = vunpack.c.h.b16 %v370
        %v440 = vunpack.c.l.b16 %v371
        %v441 = vunpack.c.h.b16 %v371
        %v442 = vunpack.c.l.b16 %v372
        %v443 = vunpack.c.h.b16 %v372
        %v444 = vunpack.c.l.b16 %v373
        %v445 = vunpack.c.h.b16 %v373
        %v446 = vunpack.c.l.b16 %v374
        %v447 = vunpack.c.h.b16 %v374
        %v448 = vunpack.c.l.b16 %v375
        %v449 = vunpack.c.h.b16 %v375
        %v450 = vunpack.c.l.b16 %v376
        %v451 = vunpack.c.h.b16 %v376
        %v452 = vunpack.c.l.b16 %v377
        %v453 = vunpack.c.h.b16 %v377
        %v454 = vunpack.c.l.b16 %v378
        %v455 = vunpack.c.h.b16 %v378
        %v456 = vunpack.c.l.b16 %v379
        %v457 = vunpack.c.h.b16 %v379
        %v458 = vunpack.c.l.b16 %v380
        %v459 = vunpack.c.h.b16 %v380
        %v460 = vunpack.c.l.b16 %v381
        %v461 = vunpack.c.h.b16 %v381
        %v462 = vpack.c.b16 %v432, %v430
        %v463 = vpack.c.b16 %v433, %v431
        %v464 = vpack.c.b16 %v436, %v434
        %v465 = vpack.c.b16 %v437, %v435
        %v466 = vpack.c.b16 %v440, %v438
        %v467 = vpack.c.b16 %v441, %v439
        %v468 = vpack.c.b16 %v444, %v442
        %v469 = vpack.c.b16 %v445, %v443
        %v470 = vpack.c.b16 %v448, %v446
        %v471 = vpack.c.b16 %v449, %v447
        %v472 = vpack.c.b16 %v452, %v450
        %v473 = vpack.c.b16 %v453, %v451
        %v474 = vpack.c.b16 %v456, %v454
        %v475 = vpack.c.b16 %v457, %v455
        %v476 = vpack.c.b16 %v460, %v458
        %v477 = vpack.c.b16 %v461, %v459
        %v526 = vunpack.c.l.b16 %v382
        %v527 = vunpack.c.h.b16 %v382
        %v528 = vunpack.c.l.b16 %v383
        %v529 = vunpack.c.h.b16 %v383
        %v530 = vunpack.c.l.b16 %v384
        %v531 = vunpack.c.h.b16 %v384
        %v532 = vunpack.c.l.b16 %v385
        %v533 = vunpack.c.h.b16 %v385
        %v534 = vunpack.c.l.b16 %v386
        %v535 = vunpack.c.h.b16 %v386
        %v536 = vunpack.c.l.b16 %v387
        %v537 = vunpack.c.h.b16 %v387
        %v538 = vunpack.c.l.b16 %v388
        %v539 = vunpack.c.h.b16 %v388
        %v540 = vunpack.c.l.b16 %v389
        %v541 = vunpack.c.h.b16 %v389
        %v542 = vunpack.c.l.b16 %v390
        %v543 = vunpack.c.h.b16 %v390
        %v544 = vunpack.c.l.b16 %v391
        %v545 = vunpack.c.h.b16 %v391
        %v546 = vunpack.c.l.b16 %v392
        %v547 = vunpack.c.h.b16 %v392
        %v548 = vunpack.c.l.b16 %v393
        %v549 = vunpack.c.h.b16 %v393
        %v550 = vunpack.c.l.b16 %v394
        %v551 = vunpack.c.h.b16 %v394
        %v552 = vunpack.c.l.b16 %v395
        %v553 = vunpack.c.h.b16 %v395
        %v554 = vunpack.c.l.b16 %v396
        %v555 = vunpack.c.h.b16 %v396
        %v556 = vunpack.c.l.b16 %v397
        %v557 = vunpack.c.h.b16 %v397
        %v558 = vunpack.c.l.b16 %v398
        %v559 = vunpack.c.h.b16 %v398
        %v560 = vunpack.c.l.b16 %v399
        %v561 = vunpack.c.h.b16 %v399
        %v562 = vunpack.c.l.b16 %v400
        %v563 = vunpack.c.h.b16 %v400
        %v564 = vunpack.c.l.b16 %v401
        %v565 = vunpack.c.h.b16 %v401
        %v566 = vunpack.c.l.b16 %v402
        %v567 = vunpack.c.h.b16 %v402
        %v568 = vunpack.c.l.b16 %v403
        %v569 = vunpack.c.h.b16 %v403
        %v570 = vunpack.c.l.b16 %v404
        %v571 = vunpack.c.h.b16 %v404
        %v572 = vunpack.c.l.b16 %v405
        %v573 = vunpack.c.h.b16 %v405
        %v574 = vunpack.c.l.b16 %v406
        %v575 = vunpack.c.h.b16 %v406
        %v576 = vunpack.c.l.b16 %v407
        %v577 = vunpack.c.h.b16 %v407
        %v578 = vunpack.c.l.b16 %v408
        %v579 = vunpack.c.h.b16 %v408
        %v580 = vunpack.c.l.b16 %v409
        %v581 = vunpack.c.h.b16 %v409
        %v582 = vunpack.c.l.b16 %v410
        %v583 = vunpack.c.h.b16 %v410
        %v584 = vunpack.c.l.b16 %v411
        %v585 = vunpack.c.h.b16 %v411
        %v586 = vunpack.c.l.b16 %v412
        %v587 = vunpack.c.h.b16 %v412
        %v588 = vunpack.c.l.b16 %v413
        %v589 = vunpack.c.h.b16 %v413
        %v590 = vpack.c.b16 %v528, %v526
        %v591 = vpack.c.b16 %v529, %v527
        %v592 = vpack.c.b16 %v532, %v530
        %v593 = vpack.c.b16 %v533, %v531
        %v594 = vpack.c.b16 %v536, %v534
        %v595 = vpack.c.b16 %v537, %v535
        %v596 = vpack.c.b16 %v540, %v538
        %v597 = vpack.c.b16 %v541, %v539
        %v598 = vpack.c.b16 %v544, %v542
        %v599 = vpack.c.b16 %v545, %v543
        %v600 = vpack.c.b16 %v548, %v546
        %v601 = vpack.c.b16 %v549, %v547
        %v602 = vpack.c.b16 %v552, %v550
        %v603 = vpack.c.b16 %v553, %v551
        %v604 = vpack.c.b16 %v556, %v554
        %v605 = vpack.c.b16 %v557, %v555
        %v606 = vpack.c.b16 %v560, %v558
        %v607 = vpack.c.b16 %v561, %v559
        %v608 = vpack.c.b16 %v564, %v562
        %v609 = vpack.c.b16 %v565, %v563
        %v610 = vpack.c.b16 %v568, %v566
        %v611 = vpack.c.b16 %v569, %v567
        %v612 = vpack.c.b16 %v572, %v570
        %v613 = vpack.c.b16 %v573, %v571
        %v614 = vpack.c.b16 %v576, %v574
        %v615 = vpack.c.b16 %v577, %v575
        %v616 = vpack.c.b16 %v580, %v578
        %v617 = vpack.c.b16 %v581, %v579
        %v618 = vpack.c.b16 %v584, %v582
        %v619 = vpack.c.b16 %v585, %v583
        %v620 = vpack.c.b16 %v588, %v586
        %v621 = vpack.c.b16 %v589, %v587
        %654 = vmatpush.bf16.msra.mxu0 %v604
        %655 = vmatpush.bf16.msra.mxu0 %v602
        %656 = vmatpush.bf16.msra.mxu0 %v600
        %657 = vmatpush.bf16.msra.mxu0 %v598
        %658 = vmatpush.bf16.msra.mxu0 %v596
        %659 = vmatpush.bf16.msra.mxu0 %v594
        %660 = vmatpush.bf16.msra.mxu0 %v592
        %661 = vmatpush.bf16.msra.mxu0 %v590
        %662 = vmatmul.bf16.gmra.mxu0 %v462
        %v663 = vpop.f32.mrf.mxu0
        %v664 = vadd.f32 0.0, %v663
        %v665 = vpop.f32.mrf.mxu0
        %v666 = vadd.f32 0.0, %v665
        %667 = vmatmul.bf16.gmra.mxu0 %v464
        %v668 = vpop.f32.mrf.mxu0
        %v669 = vadd.f32 0.0, %v668
        %v670 = vpop.f32.mrf.mxu0
        %v671 = vadd.f32 0.0, %v670
        %672 = vmatmul.bf16.gmra.mxu0 %v466
        %v673 = vpop.f32.mrf.mxu0
        %v674 = vadd.f32 0.0, %v673
        %v675 = vpop.f32.mrf.mxu0
        %v676 = vadd.f32 0.0, %v675
        %677 = vmatmul.bf16.gmra.mxu0 %v468
        %v678 = vpop.f32.mrf.mxu0
        %v679 = vadd.f32 0.0, %v678
        %v680 = vpop.f32.mrf.mxu0
        %v681 = vadd.f32 0.0, %v680
        %682 = vmatmul.bf16.gmra.mxu0 %v470
        %v683 = vpop.f32.mrf.mxu0
        %v684 = vadd.f32 0.0, %v683
        %v685 = vpop.f32.mrf.mxu0
        %v686 = vadd.f32 0.0, %v685
        %687 = vmatmul.bf16.gmra.mxu0 %v472
        %v688 = vpop.f32.mrf.mxu0
        %v689 = vadd.f32 0.0, %v688
        %v690 = vpop.f32.mrf.mxu0
        %v691 = vadd.f32 0.0, %v690
        %692 = vmatmul.bf16.gmra.mxu0 %v474
        %v693 = vpop.f32.mrf.mxu0
        %v694 = vadd.f32 0.0, %v693
        %v695 = vpop.f32.mrf.mxu0
        %v696 = vadd.f32 0.0, %v695
        %697 = vmatmul.bf16.gmra.mxu0 %v476
        %v698 = vpop.f32.mrf.mxu0
        %v699 = vadd.f32 0.0, %v698
        %v700 = vpop.f32.mrf.mxu0
        %v701 = vadd.f32 0.0, %v700
        %702 = vdwg.mxu0
        %703 = vmatpush.bf16.msra.mxu0 %v620
        %704 = vmatpush.bf16.msra.mxu0 %v618
        %705 = vmatpush.bf16.msra.mxu0 %v616
        %706 = vmatpush.bf16.msra.mxu0 %v614
        %707 = vmatpush.bf16.msra.mxu0 %v612
        %708 = vmatpush.bf16.msra.mxu0 %v610
        %709 = vmatpush.bf16.msra.mxu0 %v608
        %710 = vmatpush.bf16.msra.mxu0 %v606
        %711 = vmatmul.bf16.gmra.mxu0 %v463
        %v712 = vpop.f32.mrf.mxu0
        %v713 = vadd.f32 %v664, %v712
        %v714 = vpop.f32.mrf.mxu0
        %v715 = vadd.f32 %v666, %v714
        %716 = vmatmul.bf16.gmra.mxu0 %v465
        %v717 = vpop.f32.mrf.mxu0
        %v718 = vadd.f32 %v669, %v717
        %v719 = vpop.f32.mrf.mxu0
        %v720 = vadd.f32 %v671, %v719
        %721 = vmatmul.bf16.gmra.mxu0 %v467
        %v722 = vpop.f32.mrf.mxu0
        %v723 = vadd.f32 %v674, %v722
        %v724 = vpop.f32.mrf.mxu0
        %v725 = vadd.f32 %v676, %v724
        %726 = vmatmul.bf16.gmra.mxu0 %v469
        %v727 = vpop.f32.mrf.mxu0
        %v728 = vadd.f32 %v679, %v727
        %v729 = vpop.f32.mrf.mxu0
        %v730 = vadd.f32 %v681, %v729
        %731 = vmatmul.bf16.gmra.mxu0 %v471
        %v732 = vpop.f32.mrf.mxu0
        %v733 = vadd.f32 %v684, %v732
        %v734 = vpop.f32.mrf.mxu0
        %v735 = vadd.f32 %v686, %v734
        %736 = vmatmul.bf16.gmra.mxu0 %v473
        %v737 = vpop.f32.mrf.mxu0
        %v738 = vadd.f32 %v689, %v737
        %v739 = vpop.f32.mrf.mxu0
        %v740 = vadd.f32 %v691, %v739
        %741 = vmatmul.bf16.gmra.mxu0 %v475
        %v742 = vpop.f32.mrf.mxu0
        %v743 = vadd.f32 %v694, %v742
        %v744 = vpop.f32.mrf.mxu0
        %v745 = vadd.f32 %v696, %v744
        %746 = vmatmul.bf16.gmra.mxu0 %v477
        %v747 = vpop.f32.mrf.mxu0
        %v748 = vadd.f32 %v699, %v747
        %v749 = vpop.f32.mrf.mxu0
        %v750 = vadd.f32 %v701, %v749
        %751 = vdwg.mxu0
        %752 = vmatpush.bf16.msra.mxu0 %v605
        %753 = vmatpush.bf16.msra.mxu0 %v603
        %754 = vmatpush.bf16.msra.mxu0 %v601
        %755 = vmatpush.bf16.msra.mxu0 %v599
        %756 = vmatpush.bf16.msra.mxu0 %v597
        %757 = vmatpush.bf16.msra.mxu0 %v595
        %758 = vmatpush.bf16.msra.mxu0 %v593
        %759 = vmatpush.bf16.msra.mxu0 %v591
        %760 = vmatmul.bf16.gmra.mxu0 %v462
        %v761 = vpop.f32.mrf.mxu0
        %v762 = vadd.f32 0.0, %v761
        %v763 = vpop.f32.mrf.mxu0
        %v764 = vadd.f32 0.0, %v763
        %765 = vmatmul.bf16.gmra.mxu0 %v464
        %v766 = vpop.f32.mrf.mxu0
        %v767 = vadd.f32 0.0, %v766
        %v768 = vpop.f32.mrf.mxu0
        %v769 = vadd.f32 0.0, %v768
        %770 = vmatmul.bf16.gmra.mxu0 %v466
        %v771 = vpop.f32.mrf.mxu0
        %v772 = vadd.f32 0.0, %v771
        %v773 = vpop.f32.mrf.mxu0
        %v774 = vadd.f32 0.0, %v773
        %775 = vmatmul.bf16.gmra.mxu0 %v468
        %v776 = vpop.f32.mrf.mxu0
        %v777 = vadd.f32 0.0, %v776
        %v778 = vpop.f32.mrf.mxu0
        %v779 = vadd.f32 0.0, %v778
        %780 = vmatmul.bf16.gmra.mxu0 %v470
        %v781 = vpop.f32.mrf.mxu0
        %v782 = vadd.f32 0.0, %v781
        %v783 = vpop.f32.mrf.mxu0
        %v784 = vadd.f32 0.0, %v783
        %785 = vmatmul.bf16.gmra.mxu0 %v472
        %v786 = vpop.f32.mrf.mxu0
        %v787 = vadd.f32 0.0, %v786
        %v788 = vpop.f32.mrf.mxu0
        %v789 = vadd.f32 0.0, %v788
        %790 = vmatmul.bf16.gmra.mxu0 %v474
        %v791 = vpop.f32.mrf.mxu0
        %v792 = vadd.f32 0.0, %v791
        %v793 = vpop.f32.mrf.mxu0
        %v794 = vadd.f32 0.0, %v793
        %795 = vmatmul.bf16.gmra.mxu0 %v476
        %v796 = vpop.f32.mrf.mxu0
        %v797 = vadd.f32 0.0, %v796
        %v798 = vpop.f32.mrf.mxu0
        %v799 = vadd.f32 0.0, %v798
        %800 = vdwg.mxu0
        %801 = vmatpush.bf16.msra.mxu0 %v621
        %802 = vmatpush.bf16.msra.mxu0 %v619
        %803 = vmatpush.bf16.msra.mxu0 %v617
        %804 = vmatpush.bf16.msra.mxu0 %v615
        %805 = vmatpush.bf16.msra.mxu0 %v613
        %806 = vmatpush.bf16.msra.mxu0 %v611
        %807 = vmatpush.bf16.msra.mxu0 %v609
        %808 = vmatpush.bf16.msra.mxu0 %v607
        %809 = vmatmul.bf16.gmra.mxu0 %v463
        %v810 = vpop.f32.mrf.mxu0
        %v811 = vadd.f32 %v762, %v810
        %v812 = vpop.f32.mrf.mxu0
        %v813 = vadd.f32 %v764, %v812
        %814 = vmatmul.bf16.gmra.mxu0 %v465
        %v815 = vpop.f32.mrf.mxu0
        %v816 = vadd.f32 %v767, %v815
        %v817 = vpop.f32.mrf.mxu0
        %v818 = vadd.f32 %v769, %v817
        %819 = vmatmul.bf16.gmra.mxu0 %v467
        %v820 = vpop.f32.mrf.mxu0
        %v821 = vadd.f32 %v772, %v820
        %v822 = vpop.f32.mrf.mxu0
        %v823 = vadd.f32 %v774, %v822
        %824 = vmatmul.bf16.gmra.mxu0 %v469
        %v825 = vpop.f32.mrf.mxu0
        %v826 = vadd.f32 %v777, %v825
        %v827 = vpop.f32.mrf.mxu0
        %v828 = vadd.f32 %v779, %v827
        %829 = vmatmul.bf16.gmra.mxu0 %v471
        %v830 = vpop.f32.mrf.mxu0
        %v831 = vadd.f32 %v782, %v830
        %v832 = vpop.f32.mrf.mxu0
        %v833 = vadd.f32 %v784, %v832
        %834 = vmatmul.bf16.gmra.mxu0 %v473
        %v835 = vpop.f32.mrf.mxu0
        %v836 = vadd.f32 %v787, %v835
        %v837 = vpop.f32.mrf.mxu0
        %v838 = vadd.f32 %v789, %v837
        %839 = vmatmul.bf16.gmra.mxu0 %v475
        %v840 = vpop.f32.mrf.mxu0
        %v841 = vadd.f32 %v792, %v840
        %v842 = vpop.f32.mrf.mxu0
        %v843 = vadd.f32 %v794, %v842
        %844 = vmatmul.bf16.gmra.mxu0 %v477
        %v845 = vpop.f32.mrf.mxu0
        %v846 = vadd.f32 %v797, %v845
        %v847 = vpop.f32.mrf.mxu0
        %v848 = vadd.f32 %v799, %v847
        %849 = vdwg.mxu0
        %v850 = vadd.f32 %v334, %v713
        %v851 = vadd.f32 %v335, %v811
        %v852 = vadd.f32 %v336, %v715
        %v853 = vadd.f32 %v337, %v813
        %v854 = vadd.f32 %v338, %v718
        %v855 = vadd.f32 %v339, %v816
        %v856 = vadd.f32 %v340, %v720
        %v857 = vadd.f32 %v341, %v818
        %v858 = vadd.f32 %v342, %v723
        %v859 = vadd.f32 %v343, %v821
        %v860 = vadd.f32 %v344, %v725
        %v861 = vadd.f32 %v345, %v823
        %v862 = vadd.f32 %v346, %v728
        %v863 = vadd.f32 %v347, %v826
        %v864 = vadd.f32 %v348, %v730
        %v865 = vadd.f32 %v349, %v828
        %v866 = vadd.f32 %v350, %v733
        %v867 = vadd.f32 %v351, %v831
        %v868 = vadd.f32 %v352, %v735
        %v869 = vadd.f32 %v353, %v833
        %v870 = vadd.f32 %v354, %v738
        %v871 = vadd.f32 %v355, %v836
        %v872 = vadd.f32 %v356, %v740
        %v873 = vadd.f32 %v357, %v838
        %v874 = vadd.f32 %v358, %v743
        %v875 = vadd.f32 %v359, %v841
        %v876 = vadd.f32 %v360, %v745
        %v877 = vadd.f32 %v361, %v843
        %v878 = vadd.f32 %v362, %v748
        %v879 = vadd.f32 %v363, %v846
        %v880 = vadd.f32 %v364, %v750
        %v881 = vadd.f32 %v365, %v848
        %882 = vst [vmem:[#allocation2] sm:$0xff] %v850
        %883 = vst [vmem:[#allocation2 + $0x8] sm:$0xff] %v851
        %884 = vst [vmem:[#allocation2 + $0x10] sm:$0xff] %v852
        %885 = vst [vmem:[#allocation2 + $0x18] sm:$0xff] %v853
        %886 = vst [vmem:[#allocation2 + $0x20] sm:$0xff] %v854
        %887 = vst [vmem:[#allocation2 + $0x28] sm:$0xff] %v855
        %888 = vst [vmem:[#allocation2 + $0x30] sm:$0xff] %v856
        %889 = vst [vmem:[#allocation2 + $0x38] sm:$0xff] %v857
        %890 = vst [vmem:[#allocation2 + $0x40] sm:$0xff] %v858
        %891 = vst [vmem:[#allocation2 + $0x48] sm:$0xff] %v859
        %892 = vst [vmem:[#allocation2 + $0x50] sm:$0xff] %v860
        %893 = vst [vmem:[#allocation2 + $0x58] sm:$0xff] %v861
        %894 = vst [vmem:[#allocation2 + $0x60] sm:$0xff] %v862
        %895 = vst [vmem:[#allocation2 + $0x68] sm:$0xff] %v863
        %896 = vst [vmem:[#allocation2 + $0x70] sm:$0xff] %v864
        %897 = vst [vmem:[#allocation2 + $0x78] sm:$0xff] %v865
        %898 = vst [vmem:[#allocation2 + $0x80] sm:$0xff] %v866
        %899 = vst [vmem:[#allocation2 + $0x88] sm:$0xff] %v867
        %900 = vst [vmem:[#allocation2 + $0x90] sm:$0xff] %v868
        %901 = vst [vmem:[#allocation2 + $0x98] sm:$0xff] %v869
        %902 = vst [vmem:[#allocation2 + $0xa0] sm:$0xff] %v870
        %903 = vst [vmem:[#allocation2 + $0xa8] sm:$0xff] %v871
        %904 = vst [vmem:[#allocation2 + $0xb0] sm:$0xff] %v872
        %905 = vst [vmem:[#allocation2 + $0xb8] sm:$0xff] %v873
        %906 = vst [vmem:[#allocation2 + $0xc0] sm:$0xff] %v874
        %907 = vst [vmem:[#allocation2 + $0xc8] sm:$0xff] %v875
        %908 = vst [vmem:[#allocation2 + $0xd0] sm:$0xff] %v876
        %909 = vst [vmem:[#allocation2 + $0xd8] sm:$0xff] %v877
        %910 = vst [vmem:[#allocation2 + $0xe0] sm:$0xff] %v878
        %911 = vst [vmem:[#allocation2 + $0xe8] sm:$0xff] %v879
        %912 = vst [vmem:[#allocation2 + $0xf0] sm:$0xff] %v880
        %913 = vst [vmem:[#allocation2 + $0xf8] sm:$0xff] %v881
        %p914 = scmp.eq.s32.totalorder %s30, 1
        // Predicated region
        $region49: #{tpu_custom_call.1} parent=31 // pred_check
          %p915 = pneg %p914
        $region50: #{tpu_custom_call.1} parent=31 // pred_check_branch
          %917 = sbr.rel (%p915) target = $region52
        $region51: #{tpu_custom_call.1} parent=31 // pred_region
          %v918 = vld [vmem:[#allocation2] sm:$0xff]
          %v919 = vld [vmem:[#allocation2 + $0x8] sm:$0xff]
          %v920 = vld [vmem:[#allocation2 + $0x10] sm:$0xff]
          %v921 = vld [vmem:[#allocation2 + $0x18] sm:$0xff]
          %v922 = vld [vmem:[#allocation2 + $0x20] sm:$0xff]
          %v923 = vld [vmem:[#allocation2 + $0x28] sm:$0xff]
          %v924 = vld [vmem:[#allocation2 + $0x30] sm:$0xff]
          %v925 = vld [vmem:[#allocation2 + $0x38] sm:$0xff]
          %v926 = vld [vmem:[#allocation2 + $0x40] sm:$0xff]
          %v927 = vld [vmem:[#allocation2 + $0x48] sm:$0xff]
          %v928 = vld [vmem:[#allocation2 + $0x50] sm:$0xff]
          %v929 = vld [vmem:[#allocation2 + $0x58] sm:$0xff]
          %v930 = vld [vmem:[#allocation2 + $0x60] sm:$0xff]
          %v931 = vld [vmem:[#allocation2 + $0x68] sm:$0xff]
          %v932 = vld [vmem:[#allocation2 + $0x70] sm:$0xff]
          %v933 = vld [vmem:[#allocation2 + $0x78] sm:$0xff]
          %v934 = vld [vmem:[#allocation2 + $0x80] sm:$0xff]
          %v935 = vld [vmem:[#allocation2 + $0x88] sm:$0xff]
          %v936 = vld [vmem:[#allocation2 + $0x90] sm:$0xff]
          %v937 = vld [vmem:[#allocation2 + $0x98] sm:$0xff]
          %v938 = vld [vmem:[#allocation2 + $0xa0] sm:$0xff]
          %v939 = vld [vmem:[#allocation2 + $0xa8] sm:$0xff]
          %v940 = vld [vmem:[#allocation2 + $0xb0] sm:$0xff]
          %v941 = vld [vmem:[#allocation2 + $0xb8] sm:$0xff]
          %v942 = vld [vmem:[#allocation2 + $0xc0] sm:$0xff]
          %v943 = vld [vmem:[#allocation2 + $0xc8] sm:$0xff]
          %v944 = vld [vmem:[#allocation2 + $0xd0] sm:$0xff]
          %v945 = vld [vmem:[#allocation2 + $0xd8] sm:$0xff]
          %v946 = vld [vmem:[#allocation2 + $0xe0] sm:$0xff]
          %v947 = vld [vmem:[#allocation2 + $0xe8] sm:$0xff]
          %v948 = vld [vmem:[#allocation2 + $0xf0] sm:$0xff]
          %v949 = vld [vmem:[#allocation2 + $0xf8] sm:$0xff]
          %950 = vst [vmem:[%s284] sm:$0xff] %v918
          %951 = vst [vmem:[%s284 + $0x8] sm:$0xff] %v919
          %952 = vst [vmem:[%s284 + $0x10] sm:$0xff] %v920
          %953 = vst [vmem:[%s284 + $0x18] sm:$0xff] %v921
          %954 = vst [vmem:[%s284 + $0x20] sm:$0xff] %v922
          %955 = vst [vmem:[%s284 + $0x28] sm:$0xff] %v923
          %956 = vst [vmem:[%s284 + $0x30] sm:$0xff] %v924
          %957 = vst [vmem:[%s284 + $0x38] sm:$0xff] %v925
          %958 = vst [vmem:[%s284 + $0x40] sm:$0xff] %v926
          %959 = vst [vmem:[%s284 + $0x48] sm:$0xff] %v927
          %960 = vst [vmem:[%s284 + $0x50] sm:$0xff] %v928
          %961 = vst [vmem:[%s284 + $0x58] sm:$0xff] %v929
          %962 = vst [vmem:[%s284 + $0x60] sm:$0xff] %v930
          %963 = vst [vmem:[%s284 + $0x68] sm:$0xff] %v931
          %964 = vst [vmem:[%s284 + $0x70] sm:$0xff] %v932
          %965 = vst [vmem:[%s284 + $0x78] sm:$0xff] %v933
          %966 = vst [vmem:[%s284 + $0x80] sm:$0xff] %v934
          %967 = vst [vmem:[%s284 + $0x88] sm:$0xff] %v935
          %968 = vst [vmem:[%s284 + $0x90] sm:$0xff] %v936
          %969 = vst [vmem:[%s284 + $0x98] sm:$0xff] %v937
          %970 = vst [vmem:[%s284 + $0xa0] sm:$0xff] %v938
          %971 = vst [vmem:[%s284 + $0xa8] sm:$0xff] %v939
          %972 = vst [vmem:[%s284 + $0xb0] sm:$0xff] %v940
          %973 = vst [vmem:[%s284 + $0xb8] sm:$0xff] %v941
          %974 = vst [vmem:[%s284 + $0xc0] sm:$0xff] %v942
          %975 = vst [vmem:[%s284 + $0xc8] sm:$0xff] %v943
          %976 = vst [vmem:[%s284 + $0xd0] sm:$0xff] %v944
          %977 = vst [vmem:[%s284 + $0xd8] sm:$0xff] %v945
          %978 = vst [vmem:[%s284 + $0xe0] sm:$0xff] %v946
          %979 = vst [vmem:[%s284 + $0xe8] sm:$0xff] %v947
          %980 = vst [vmem:[%s284 + $0xf0] sm:$0xff] %v948
          %981 = vst [vmem:[%s284 + $0xf8] sm:$0xff] %v949
        $region52: #{tpu_custom_call.1} parent=31 // pred_fallthru
          _
        %s982 = sand.u32 %s134, 1
        %s983 = scalar_lea.sflag [#allocation5], %s982
        %s984 = sand.u32 %s134, 1
        %s985 = smul.addr %s984, 256
        %s986 = scalar_lea.vmem [#allocation9], %s985
        // Predicated region
        $region53: #{tpu_custom_call.1} parent=31 // pred_check
          %p987 = pneg %p144
        $region54: #{tpu_custom_call.1} parent=31 // pred_check_branch
          %989 = sbr.rel (%p987) target = $region56
        $region55: #{tpu_custom_call.1} parent=31 // pred_region
          %s990 = smul.u32 16, %s28
          %s991 = smul.u32 2, %s29
          %993 = vsyncadd %s983, 0
          %s994 = smul.addr %s990, 2
          %s995 = sadd.s32 %s991, %s994
          %s996 = smul.addr %s995, 8
          %s997 = scalar_lea.hbm %s3, %s996
          %s998 = sshll.u32 %s986, 4
          %s999 = int_to_ptr.vmem [resolvable:$true] %s998
          %s1000 = sshll.u32 %s997, 4
          %s1001 = int_to_ptr.hbm [resolvable:$true] %s1000
          %1006 = dma.vmem_to_hbm [thread:$0]  %s999, 4096, %s1001, %s983, 256, 256, 16
        $region56: #{tpu_custom_call.1} parent=31 // pred_fallthru
          _
      $region32: #{tpu_custom_call.1} parent=5 // pred_fallthru
        _
      %p1007 = scmp.le.s32.totalorder 2, %s18
      // Predicated region
      $region57: #{tpu_custom_call.1} parent=5 // pred_check
        %p1008 = pneg %p1007
      $region58: #{tpu_custom_call.1} parent=5 // pred_check_branch
        %1010 = sbr.rel (%p1008) target = $region60
      $region59: #{tpu_custom_call.1} parent=5 // pred_region
        %s1011 = ssub.s32 %s18, 2
        // Predicated region
        $region61: #{tpu_custom_call.1} parent=59 // pred_check
          %p1012 = pneg %p150
        $region62: #{tpu_custom_call.1} parent=59 // pred_check_branch
          %1014 = sbr.rel (%p1012) target = $region64
        $region63: #{tpu_custom_call.1} parent=59 // pred_region
          %s1015 = sand.u32 %s135, 1
          %s1016 = scalar_lea.sflag [#allocation5], %s1015
          %s1017 = sand.u32 %s135, 1
          %s1018 = smul.addr %s1017, 256
          %s1019 = scalar_lea.vmem [#allocation9], %s1018
          %1021 = dma.done %s1016, 4096
        $region64: #{tpu_custom_call.1} parent=59 // pred_fallthru
          _
      $region60: #{tpu_custom_call.1} parent=5 // pred_fallthru
        _
    $region6: #{tpu_custom_call.1} parent=1 // loop_footer
      %s22 = sadd.s32 1, %s18
    $region7: #{tpu_custom_call.1} parent=1 // loop_footer_branch
      %17 = sbr.rel target = $region3
    $region8: #{tpu_custom_call.1} parent=1 // loop_exit
      _
    %1022 = vsyncpa [#allocation4], 1
    %s1023 = scalar_lea.sflag [#allocation4], 1
    %1024 = vsyncpa %s1023, 1
    %1025 = vsyncpa [#allocation7], 1
    %s1026 = scalar_lea.sflag [#allocation7], 1
    %1027 = vsyncpa %s1026, 1
    %1028 = vsyncpa [#allocation5], 1
    %s1029 = scalar_lea.sflag [#allocation5], 1
    %1030 = vsyncpa %s1029, 1

</llo_original>
